<compile_context>
chip_gen: v7x
topology: tpu7x:2x2x1
jax: 0.10.0
libtpu: 0.0.40
codegen_flags: <defaults>
</compile_context>

<pallas_src>
import functools

import jax
import jax.numpy as jnp
import numpy as np
from jax import lax
from jax.experimental import pallas as pl
from jax.experimental.pallas import tpu as pltpu


def _gather_rows_kernel(idx_ref, bev_hbm, out_ref, gbuf, sems, *, tp, k):
    """Gather `tp` rows of the HBM row-matrix (one per point) into out_ref.

    idx_ref : SMEM int32[(chunk_points,)]  scalar-prefetched flat voxel indices
    bev_hbm : HBM   f32[(Nvox, C)]         channels-last BEV rows (pl.ANY)
    out_ref : VMEM  f32[(tp, C)]           output block for this point tile
    gbuf    : VMEM  f32[(tp, C)]           DMA landing buffer
    sems    : DMA semaphores, ring of k    (k gathers kept in flight)
    """
    t = pl.program_id(0)
    base = t * tp

    def copy_desc(p):
        row = idx_ref[base + p]                       # SMEM scalar read
        return pltpu.make_async_copy(
            bev_hbm.at[pl.ds(row, 1), :],             # (1, C) contiguous HBM row
            gbuf.at[pl.ds(p, 1), :],                  # row p of the VMEM buffer
            sems.at[p % k],
        )

    # Prologue: put the first K row-gather DMAs in flight.
    for p in range(k):
        copy_desc(p).start()

    # Steady state: wait for copy p, then immediately launch copy p+K into the
    # semaphore slot that just freed up.  All copies are waited by loop end.
    def body(p, carry):
        copy_desc(p).wait()

        @pl.when(p + k < tp)
        def _():
            copy_desc(p + k).start()

        return carry

    lax.fori_loop(0, tp, body, 0)

    # Single vector copy into the output block; the block writeback to HBM is
    # one contiguous TP*C*4-byte DMA.
    out_ref[...] = gbuf[...]
    # TODO(synk): predict()'s per-point softmax/argmax could be fused here for
    # free (VPU/XLU slots are idle), but forward() must return raw logits.


def _gather_chunk(bev_rows, flat_idx, tp, k):
    """One pallas_call over a chunk of points (chunk size is a multiple of tp)."""
    npts = flat_idx.shape[0]
    _, c = bev_rows.shape
    kernel = functools.partial(_gather_rows_kernel, tp=tp, k=k)
    return pl.pallas_call(
        kernel,
        out_shape=jax.ShapeDtypeStruct((npts, c), bev_rows.dtype),
        grid_spec=pltpu.PrefetchScalarGridSpec(
            num_scalar_prefetch=1,                    # flat_idx -> SMEM
            grid=(npts // tp,),
            in_specs=[pl.BlockSpec(memory_space=pl.ANY)],   # BEV stays in HBM
            out_specs=pl.BlockSpec((tp, c), lambda t, idx_ref: (t, 0)),
            scratch_shapes=[
                pltpu.VMEM((tp, c), bev_rows.dtype),        # gather buffer
                pltpu.SemaphoreType.DMA((k,)),              # in-flight ring
            ],
        ),
        compiler_params=pltpu.CompilerParams(
            dimension_semantics=("parallel",)),       # independent point tiles
    )(flat_idx, bev_rows)


def point_seg_polarnet_head_forward(voxel_features, point_vcoors, *,
                                    channels_last=False,
                                    tile_points=256,
                                    inflight_copies=8,
                                    max_points_per_call=65536):
    """voxel_features: (B, C, X, Y, Z) f32 (or (B, X, Y, Z, C) if channels_last)
       point_vcoors:   (Np, 4) int32 with columns (b, x, y, z)
       returns point_logits: (Np, C) f32
    """
    if channels_last:
        B, X, Y, Z, C = voxel_features.shape
        bev = voxel_features
    else:
        B, C, X, Y, Z = voxel_features.shape
        # NOTE: this is a full read+write pass over the voxel volume in HBM.
        # If the upstream layer can emit channels-last activations, pass
        # channels_last=True and this pass disappears; the gather kernel itself
        # only touches Np*C*4 bytes.
        bev = jnp.transpose(voxel_features, (0, 2, 3, 4, 1))
    nvox = B * X * Y * Z
    bev_rows = bev.reshape(nvox, C)                   # (Nvox, C) contiguous rows

    # Flat voxel index per point: ((b*X + x)*Y + y)*Z + z.  Clamp every
    # coordinate so padded / invalid points (e.g. -1) cannot drive an
    # out-of-range DMA.
    vc = point_vcoors.astype(jnp.int32)
    b = jnp.clip(vc[:, 0], 0, B - 1)
    x = jnp.clip(vc[:, 1], 0, X - 1)
    y = jnp.clip(vc[:, 2], 0, Y - 1)
    z = jnp.clip(vc[:, 3], 0, Z - 1)
    flat_idx = (((b * X + x) * Y + y) * Z + z).astype(jnp.int32)   # (Np,)

    np_points = flat_idx.shape[0]
    tp = tile_points
    np_pad = ((np_points + tp - 1) // tp) * tp        # static pad to tile multiple
    if np_pad != np_points:
        flat_idx = jnp.concatenate(
            [flat_idx, jnp.zeros((np_pad - np_points,), jnp.int32)])

    # Bound the SMEM footprint of the scalar-prefetched index array by splitting
    # very large point sets across multiple pallas_call invocations.
    chunk = max(tp, (max_points_per_call // tp) * tp)
    outs = []
    for start in range(0, np_pad, chunk):
        idx_chunk = flat_idx[start:min(start + chunk, np_pad)]
        outs.append(_gather_chunk(bev_rows, idx_chunk, tp, inflight_copies))
    out = outs[0] if len(outs) == 1 else jnp.concatenate(outs, axis=0)
    return out[:np_points]

    # TODO(synk): get_loss (CrossEntropy + lovasz_softmax) and predict() are
    # training/inference host-side glue, not part of the forward hot path.


if __name__ == "__main__":
    key = jax.random.PRNGKey(0)
    k1, k2, k3, k4, k5 = jax.random.split(key, 5)

    # Small shapes consistent with the module: voxel_features (B, n_cls, X, Y, Z)
    B, C, X, Y, Z = 2, 8, 8, 8, 4
    Np = 64

    voxel_features = jax.random.normal(k1, (B, C, X, Y, Z), dtype=jnp.float32)
    point_vcoors = jnp.stack(
        [
            jax.random.randint(k2, (Np,), 0, B, dtype=jnp.int32),
            jax.random.randint(k3, (Np,), 0, X, dtype=jnp.int32),
            jax.random.randint(k4, (Np,), 0, Y, dtype=jnp.int32),
            jax.random.randint(k5, (Np,), 0, Z, dtype=jnp.int32),
        ],
        axis=1,
    )

    point_logits = point_seg_polarnet_head_forward(voxel_features, point_vcoors)
    point_logits = jax.block_until_ready(point_logits)

    # Reference (pure JAX) gather, same semantics as the PyTorch advanced indexing.
    bev_ref = jnp.transpose(voxel_features, (0, 2, 3, 4, 1))
    expected = bev_ref[point_vcoors[:, 0], point_vcoors[:, 1],
                       point_vcoors[:, 2], point_vcoors[:, 3], :]
    np.testing.assert_allclose(np.asarray(point_logits), np.asarray(expected),
                               rtol=1e-6, atol=1e-6)
    print("KERNEL_OK")
</pallas_src>

<mosaic_0001>
module attributes {stable_mosaic.version = 11 : i64} {
  func.func @_gather_rows_kernel(%arg0: i32, %arg1: memref<256xi32, #tpu.memory_space<smem>>, %arg2: memref<512x8xf32, #tpu.memory_space<any>>, %arg3: memref<256x8xf32, #tpu.memory_space<vmem>>, %arg4: memref<256x8xf32, #tpu.memory_space<vmem>>, %arg5: memref<8x!tpu.dma_semaphore, #tpu.memory_space<semaphore_mem>>) attributes {dimension_semantics = [#tpu.dimension_semantics<parallel>], iteration_bounds = array<i64: 1>, scalar_prefetch = 1 : i64, scratch_operands = 2 : i64, tpu.core_type = #tpu.core_type<tc>, window_params = [{}, {transform_indices = @transform_1, window_bounds = array<i64: 256, 8>}]} {
    %c256_i32 = arith.constant 256 : i32
    %0 = arith.muli %arg0, %c256_i32 : i32
    %c0_i32 = arith.constant 0 : i32
    %1 = arith.addi %0, %c0_i32 : i32
    %2 = arith.index_cast %1 : i32 to index
    %3 = memref.load %arg1[%2] : memref<256xi32, #tpu.memory_space<smem>>
    %c0_i32_0 = arith.constant 0 : i32
    %c0_i32_1 = arith.constant 0 : i32
    %4 = tpu.memref_slice %arg2[%3, %c0_i32_1] : memref<512x8xf32, #tpu.memory_space<any>> -> memref<1x8xf32, #tpu.memory_space<any>>
    %c0_i32_2 = arith.constant 0 : i32
    %c0_i32_3 = arith.constant 0 : i32
    %5 = tpu.memref_slice %arg4[%c0_i32_2, %c0_i32_3] : memref<256x8xf32, #tpu.memory_space<vmem>> -> memref<1x8xf32, #tpu.memory_space<vmem>>
    %6 = tpu.memref_slice %arg5[%c0_i32_0] : memref<8x!tpu.dma_semaphore, #tpu.memory_space<semaphore_mem>> -> memref<1x!tpu.dma_semaphore, #tpu.memory_space<semaphore_mem>>
    %7 = tpu.memref_squeeze %6 : memref<1x!tpu.dma_semaphore, #tpu.memory_space<semaphore_mem>> -> memref<!tpu.dma_semaphore, #tpu.memory_space<semaphore_mem>>
    tpu.enqueue_dma source(%4 : memref<1x8xf32, #tpu.memory_space<any>>) target(%5 : memref<1x8xf32, #tpu.memory_space<vmem>>) target_semaphore(%7 : memref<!tpu.dma_semaphore, #tpu.memory_space<semaphore_mem>>)
    %c1_i32 = arith.constant 1 : i32
    %8 = arith.addi %0, %c1_i32 : i32
    %9 = arith.index_cast %8 : i32 to index
    %10 = memref.load %arg1[%9] : memref<256xi32, #tpu.memory_space<smem>>
    %c1_i32_4 = arith.constant 1 : i32
    %c0_i32_5 = arith.constant 0 : i32
    %11 = tpu.memref_slice %arg2[%10, %c0_i32_5] : memref<512x8xf32, #tpu.memory_space<any>> -> memref<1x8xf32, #tpu.memory_space<any>>
    %c1_i32_6 = arith.constant 1 : i32
    %c0_i32_7 = arith.constant 0 : i32
    %12 = tpu.memref_slice %arg4[%c1_i32_6, %c0_i32_7] : memref<256x8xf32, #tpu.memory_space<vmem>> -> memref<1x8xf32, #tpu.memory_space<vmem>>
    %13 = tpu.memref_slice %arg5[%c1_i32_4] : memref<8x!tpu.dma_semaphore, #tpu.memory_space<semaphore_mem>> -> memref<1x!tpu.dma_semaphore, #tpu.memory_space<semaphore_mem>>
    %14 = tpu.memref_squeeze %13 : memref<1x!tpu.dma_semaphore, #tpu.memory_space<semaphore_mem>> -> memref<!tpu.dma_semaphore, #tpu.memory_space<semaphore_mem>>
    tpu.enqueue_dma source(%11 : memref<1x8xf32, #tpu.memory_space<any>>) target(%12 : memref<1x8xf32, #tpu.memory_space<vmem>>) target_semaphore(%14 : memref<!tpu.dma_semaphore, #tpu.memory_space<semaphore_mem>>)
    %c2_i32 = arith.constant 2 : i32
    %15 = arith.addi %0, %c2_i32 : i32
    %16 = arith.index_cast %15 : i32 to index
    %17 = memref.load %arg1[%16] : memref<256xi32, #tpu.memory_space<smem>>
    %c2_i32_8 = arith.constant 2 : i32
    %c0_i32_9 = arith.constant 0 : i32
    %18 = tpu.memref_slice %arg2[%17, %c0_i32_9] : memref<512x8xf32, #tpu.memory_space<any>> -> memref<1x8xf32, #tpu.memory_space<any>>
    %c2_i32_10 = arith.constant 2 : i32
    %c0_i32_11 = arith.constant 0 : i32
    %19 = tpu.memref_slice %arg4[%c2_i32_10, %c0_i32_11] : memref<256x8xf32, #tpu.memory_space<vmem>> -> memref<1x8xf32, #tpu.memory_space<vmem>>
    %20 = tpu.memref_slice %arg5[%c2_i32_8] : memref<8x!tpu.dma_semaphore, #tpu.memory_space<semaphore_mem>> -> memref<1x!tpu.dma_semaphore, #tpu.memory_space<semaphore_mem>>
    %21 = tpu.memref_squeeze %20 : memref<1x!tpu.dma_semaphore, #tpu.memory_space<semaphore_mem>> -> memref<!tpu.dma_semaphore, #tpu.memory_space<semaphore_mem>>
    tpu.enqueue_dma source(%18 : memref<1x8xf32, #tpu.memory_space<any>>) target(%19 : memref<1x8xf32, #tpu.memory_space<vmem>>) target_semaphore(%21 : memref<!tpu.dma_semaphore, #tpu.memory_space<semaphore_mem>>)
    %c3_i32 = arith.constant 3 : i32
    %22 = arith.addi %0, %c3_i32 : i32
    %23 = arith.index_cast %22 : i32 to index
    %24 = memref.load %arg1[%23] : memref<256xi32, #tpu.memory_space<smem>>
    %c3_i32_12 = arith.constant 3 : i32
    %c0_i32_13 = arith.constant 0 : i32
    %25 = tpu.memref_slice %arg2[%24, %c0_i32_13] : memref<512x8xf32, #tpu.memory_space<any>> -> memref<1x8xf32, #tpu.memory_space<any>>
    %c3_i32_14 = arith.constant 3 : i32
    %c0_i32_15 = arith.constant 0 : i32
    %26 = tpu.memref_slice %arg4[%c3_i32_14, %c0_i32_15] : memref<256x8xf32, #tpu.memory_space<vmem>> -> memref<1x8xf32, #tpu.memory_space<vmem>>
    %27 = tpu.memref_slice %arg5[%c3_i32_12] : memref<8x!tpu.dma_semaphore, #tpu.memory_space<semaphore_mem>> -> memref<1x!tpu.dma_semaphore, #tpu.memory_space<semaphore_mem>>
    %28 = tpu.memref_squeeze %27 : memref<1x!tpu.dma_semaphore, #tpu.memory_space<semaphore_mem>> -> memref<!tpu.dma_semaphore, #tpu.memory_space<semaphore_mem>>
    tpu.enqueue_dma source(%25 : memref<1x8xf32, #tpu.memory_space<any>>) target(%26 : memref<1x8xf32, #tpu.memory_space<vmem>>) target_semaphore(%28 : memref<!tpu.dma_semaphore, #tpu.memory_space<semaphore_mem>>)
    %c4_i32 = arith.constant 4 : i32
    %29 = arith.addi %0, %c4_i32 : i32
    %30 = arith.index_cast %29 : i32 to index
    %31 = memref.load %arg1[%30] : memref<256xi32, #tpu.memory_space<smem>>
    %c4_i32_16 = arith.constant 4 : i32
    %c0_i32_17 = arith.constant 0 : i32
    %32 = tpu.memref_slice %arg2[%31, %c0_i32_17] : memref<512x8xf32, #tpu.memory_space<any>> -> memref<1x8xf32, #tpu.memory_space<any>>
    %c4_i32_18 = arith.constant 4 : i32
    %c0_i32_19 = arith.constant 0 : i32
    %33 = tpu.memref_slice %arg4[%c4_i32_18, %c0_i32_19] : memref<256x8xf32, #tpu.memory_space<vmem>> -> memref<1x8xf32, #tpu.memory_space<vmem>>
    %34 = tpu.memref_slice %arg5[%c4_i32_16] : memref<8x!tpu.dma_semaphore, #tpu.memory_space<semaphore_mem>> -> memref<1x!tpu.dma_semaphore, #tpu.memory_space<semaphore_mem>>
    %35 = tpu.memref_squeeze %34 : memref<1x!tpu.dma_semaphore, #tpu.memory_space<semaphore_mem>> -> memref<!tpu.dma_semaphore, #tpu.memory_space<semaphore_mem>>
    tpu.enqueue_dma source(%32 : memref<1x8xf32, #tpu.memory_space<any>>) target(%33 : memref<1x8xf32, #tpu.memory_space<vmem>>) target_semaphore(%35 : memref<!tpu.dma_semaphore, #tpu.memory_space<semaphore_mem>>)
    %c5_i32 = arith.constant 5 : i32
    %36 = arith.addi %0, %c5_i32 : i32
    %37 = arith.index_cast %36 : i32 to index
    %38 = memref.load %arg1[%37] : memref<256xi32, #tpu.memory_space<smem>>
    %c5_i32_20 = arith.constant 5 : i32
    %c0_i32_21 = arith.constant 0 : i32
    %39 = tpu.memref_slice %arg2[%38, %c0_i32_21] : memref<512x8xf32, #tpu.memory_space<any>> -> memref<1x8xf32, #tpu.memory_space<any>>
    %c5_i32_22 = arith.constant 5 : i32
    %c0_i32_23 = arith.constant 0 : i32
    %40 = tpu.memref_slice %arg4[%c5_i32_22, %c0_i32_23] : memref<256x8xf32, #tpu.memory_space<vmem>> -> memref<1x8xf32, #tpu.memory_space<vmem>>
    %41 = tpu.memref_slice %arg5[%c5_i32_20] : memref<8x!tpu.dma_semaphore, #tpu.memory_space<semaphore_mem>> -> memref<1x!tpu.dma_semaphore, #tpu.memory_space<semaphore_mem>>
    %42 = tpu.memref_squeeze %41 : memref<1x!tpu.dma_semaphore, #tpu.memory_space<semaphore_mem>> -> memref<!tpu.dma_semaphore, #tpu.memory_space<semaphore_mem>>
    tpu.enqueue_dma source(%39 : memref<1x8xf32, #tpu.memory_space<any>>) target(%40 : memref<1x8xf32, #tpu.memory_space<vmem>>) target_semaphore(%42 : memref<!tpu.dma_semaphore, #tpu.memory_space<semaphore_mem>>)
    %c6_i32 = arith.constant 6 : i32
    %43 = arith.addi %0, %c6_i32 : i32
    %44 = arith.index_cast %43 : i32 to index
    %45 = memref.load %arg1[%44] : memref<256xi32, #tpu.memory_space<smem>>
    %c6_i32_24 = arith.constant 6 : i32
    %c0_i32_25 = arith.constant 0 : i32
    %46 = tpu.memref_slice %arg2[%45, %c0_i32_25] : memref<512x8xf32, #tpu.memory_space<any>> -> memref<1x8xf32, #tpu.memory_space<any>>
    %c6_i32_26 = arith.constant 6 : i32
    %c0_i32_27 = arith.constant 0 : i32
    %47 = tpu.memref_slice %arg4[%c6_i32_26, %c0_i32_27] : memref<256x8xf32, #tpu.memory_space<vmem>> -> memref<1x8xf32, #tpu.memory_space<vmem>>
    %48 = tpu.memref_slice %arg5[%c6_i32_24] : memref<8x!tpu.dma_semaphore, #tpu.memory_space<semaphore_mem>> -> memref<1x!tpu.dma_semaphore, #tpu.memory_space<semaphore_mem>>
    %49 = tpu.memref_squeeze %48 : memref<1x!tpu.dma_semaphore, #tpu.memory_space<semaphore_mem>> -> memref<!tpu.dma_semaphore, #tpu.memory_space<semaphore_mem>>
    tpu.enqueue_dma source(%46 : memref<1x8xf32, #tpu.memory_space<any>>) target(%47 : memref<1x8xf32, #tpu.memory_space<vmem>>) target_semaphore(%49 : memref<!tpu.dma_semaphore, #tpu.memory_space<semaphore_mem>>)
    %c7_i32 = arith.constant 7 : i32
    %50 = arith.addi %0, %c7_i32 : i32
    %51 = arith.index_cast %50 : i32 to index
    %52 = memref.load %arg1[%51] : memref<256xi32, #tpu.memory_space<smem>>
    %c7_i32_28 = arith.constant 7 : i32
    %c0_i32_29 = arith.constant 0 : i32
    %53 = tpu.memref_slice %arg2[%52, %c0_i32_29] : memref<512x8xf32, #tpu.memory_space<any>> -> memref<1x8xf32, #tpu.memory_space<any>>
    %c7_i32_30 = arith.constant 7 : i32
    %c0_i32_31 = arith.constant 0 : i32
    %54 = tpu.memref_slice %arg4[%c7_i32_30, %c0_i32_31] : memref<256x8xf32, #tpu.memory_space<vmem>> -> memref<1x8xf32, #tpu.memory_space<vmem>>
    %55 = tpu.memref_slice %arg5[%c7_i32_28] : memref<8x!tpu.dma_semaphore, #tpu.memory_space<semaphore_mem>> -> memref<1x!tpu.dma_semaphore, #tpu.memory_space<semaphore_mem>>
    %56 = tpu.memref_squeeze %55 : memref<1x!tpu.dma_semaphore, #tpu.memory_space<semaphore_mem>> -> memref<!tpu.dma_semaphore, #tpu.memory_space<semaphore_mem>>
    tpu.enqueue_dma source(%53 : memref<1x8xf32, #tpu.memory_space<any>>) target(%54 : memref<1x8xf32, #tpu.memory_space<vmem>>) target_semaphore(%56 : memref<!tpu.dma_semaphore, #tpu.memory_space<semaphore_mem>>)
    %c0_i32_32 = arith.constant 0 : i32
    %c256_i32_33 = arith.constant 256 : i32
    %57 = arith.addi %c0_i32_32, %c256_i32_33 : i32
    %c1_i32_34 = arith.constant 1 : i32
    scf.for %arg6 = %c0_i32_32 to %57 step %c1_i32_34  : i32 {
      %60 = arith.addi %0, %arg6 : i32
      %61 = arith.index_cast %60 : i32 to index
      %62 = memref.load %arg1[%61] : memref<256xi32, #tpu.memory_space<smem>>
      %c8_i32 = arith.constant 8 : i32
      %c0_i32_39 = arith.constant 0 : i32
      %63 = arith.cmpi eq, %c8_i32, %c0_i32_39 : i32
      %c1_i32_40 = arith.constant 1 : i32
      %64 = arith.select %63, %c1_i32_40, %c8_i32 : i32
      %65 = arith.remsi %arg6, %64 : i32
      %c0_i32_41 = arith.constant 0 : i32
      %66 = arith.cmpi ne, %65, %c0_i32_41 : i32
      %c0_i32_42 = arith.constant 0 : i32
      %67 = arith.cmpi slt, %65, %c0_i32_42 : i32
      %c0_i32_43 = arith.constant 0 : i32
      %68 = arith.cmpi slt, %64, %c0_i32_43 : i32
      %69 = arith.xori %67, %68 : i1
      %70 = arith.andi %69, %66 : i1
      %71 = arith.addi %65, %64 : i32
      %72 = arith.select %70, %71, %65 : i32
      %c0_i32_44 = arith.constant 0 : i32
      %73 = tpu.memref_slice %arg2[%62, %c0_i32_44] : memref<512x8xf32, #tpu.memory_space<any>> -> memref<1x8xf32, #tpu.memory_space<any>>
      %c0_i32_45 = arith.constant 0 : i32
      %74 = tpu.memref_slice %arg4[%arg6, %c0_i32_45] : memref<256x8xf32, #tpu.memory_space<vmem>> -> memref<1x8xf32, #tpu.memory_space<vmem>>
      %75 = tpu.memref_slice %arg5[%72] : memref<8x!tpu.dma_semaphore, #tpu.memory_space<semaphore_mem>> -> memref<1x!tpu.dma_semaphore, #tpu.memory_space<semaphore_mem>>
      %76 = tpu.memref_squeeze %75 : memref<1x!tpu.dma_semaphore, #tpu.memory_space<semaphore_mem>> -> memref<!tpu.dma_semaphore, #tpu.memory_space<semaphore_mem>>
      tpu.wait_dma2 semaphore(%76 : memref<!tpu.dma_semaphore, #tpu.memory_space<semaphore_mem>>) src(%73 : memref<1x8xf32, #tpu.memory_space<any>>) dst(%74 : memref<1x8xf32, #tpu.memory_space<vmem>>)
      %c8_i32_46 = arith.constant 8 : i32
      %77 = arith.addi %arg6, %c8_i32_46 : i32
      %c256_i32_47 = arith.constant 256 : i32
      %78 = arith.cmpi slt, %77, %c256_i32_47 : i32
      %79 = arith.extui %78 : i1 to i32
      %c0_i32_48 = arith.constant 0 : i32
      %80 = arith.cmpi ne, %79, %c0_i32_48 : i32
      scf.if %80 {
        %c8_i32_49 = arith.constant 8 : i32
        %81 = arith.addi %arg6, %c8_i32_49 : i32
        %82 = arith.addi %0, %81 : i32
        %83 = arith.index_cast %82 : i32 to index
        %84 = memref.load %arg1[%83] : memref<256xi32, #tpu.memory_space<smem>>
        %c8_i32_50 = arith.constant 8 : i32
        %c0_i32_51 = arith.constant 0 : i32
        %85 = arith.cmpi eq, %c8_i32_50, %c0_i32_51 : i32
        %c1_i32_52 = arith.constant 1 : i32
        %86 = arith.select %85, %c1_i32_52, %c8_i32_50 : i32
        %87 = arith.remsi %81, %86 : i32
        %c0_i32_53 = arith.constant 0 : i32
        %88 = arith.cmpi ne, %87, %c0_i32_53 : i32
        %c0_i32_54 = arith.constant 0 : i32
        %89 = arith.cmpi slt, %87, %c0_i32_54 : i32
        %c0_i32_55 = arith.constant 0 : i32
        %90 = arith.cmpi slt, %86, %c0_i32_55 : i32
        %91 = arith.xori %89, %90 : i1
        %92 = arith.andi %91, %88 : i1
        %93 = arith.addi %87, %86 : i32
        %94 = arith.select %92, %93, %87 : i32
        %c0_i32_56 = arith.constant 0 : i32
        %95 = tpu.memref_slice %arg2[%84, %c0_i32_56] : memref<512x8xf32, #tpu.memory_space<any>> -> memref<1x8xf32, #tpu.memory_space<any>>
        %c0_i32_57 = arith.constant 0 : i32
        %96 = tpu.memref_slice %arg4[%81, %c0_i32_57] : memref<256x8xf32, #tpu.memory_space<vmem>> -> memref<1x8xf32, #tpu.memory_space<vmem>>
        %97 = tpu.memref_slice %arg5[%94] : memref<8x!tpu.dma_semaphore, #tpu.memory_space<semaphore_mem>> -> memref<1x!tpu.dma_semaphore, #tpu.memory_space<semaphore_mem>>
        %98 = tpu.memref_squeeze %97 : memref<1x!tpu.dma_semaphore, #tpu.memory_space<semaphore_mem>> -> memref<!tpu.dma_semaphore, #tpu.memory_space<semaphore_mem>>
        tpu.enqueue_dma source(%95 : memref<1x8xf32, #tpu.memory_space<any>>) target(%96 : memref<1x8xf32, #tpu.memory_space<vmem>>) target_semaphore(%98 : memref<!tpu.dma_semaphore, #tpu.memory_space<semaphore_mem>>)
      } else {
      }
    }
    %c256_i32_35 = arith.constant 256 : i32
    %c0 = arith.constant 0 : index
    %c0_36 = arith.constant 0 : index
    %58 = vector.load %arg4[%c0, %c0_36] : memref<256x8xf32, #tpu.memory_space<vmem>>, vector<256x8xf32>
    %c0_37 = arith.constant 0 : index
    %c0_38 = arith.constant 0 : index
    %59 = vector.load %arg3[%c0_37, %c0_38] : memref<256x8xf32, #tpu.memory_space<vmem>>, vector<256x8xf32>
    tpu.vector_store %arg3[%c0_37, %c0_38], %58 {strides = array<i32>} : memref<256x8xf32, #tpu.memory_space<vmem>>, vector<256x8xf32>,
    return
  }
  func.func @transform_1(%arg0: i32, %arg1: memref<256xi32, #tpu.memory_space<smem>>) -> (i32, i32) {
    %c0_i32 = arith.constant 0 : i32
    %c0_i32_0 = arith.constant 0 : i32
    return %arg0, %c0_i32 : i32, i32
  }
}

</mosaic_0001>

<llo_original>
// kernel: tpu_custom_call.1
$region0: #{tpu_custom_call.1}
  #allocation0 [shape = 'u32[]', space=smem, size = 0x4, offset = 0x4, fixed_abs, tag = 'smem constant byte address 0x4 - core index']
  #allocation1 [shape = 'u32[144,128]{1,0:T(1,128)}', space=vmem, size = 0x12000, scoped, tag = 'internal scratch']
  #allocation2 [shape = 'f32[256,8]{1,0:T(8,128)}', space=vmem, size = 0x20000, scoped, tag = 'scratch operand']
  #allocation3 [shape = 's32[8]{0}', space=sflag, size = 0x20, scoped, tag = 'scratch operand']
  #allocation4 [shape = 's32[1]{0}', space=sflag, size = 0x4, scoped, tag = 'scoped memory for tpu_custom_call.1']
  #allocation5 [shape = 'u8[1024]{0}', space=smem, size = 0x400, scoped, tag = 'prefetched SMEM operand 0']
  #allocation6 [shape = 's32[]', space=sflag, size = 0x4, offset = 0, fixed_abs, tag = 'sflag constant byte address 0x0 - dummy sync flag']
  #allocation7 [shape = 's32[]', space=sflag, size = 0x4, offset = 0, fixed_abs, tag = 'sflag constant byte address 0x0 - dummy sync flag']
  #allocation8 [shape = 's32[]', space=sflag, size = 0x4, offset = 0, fixed_abs, tag = 'sflag constant byte address 0x0 - dummy sync flag']
  #allocation9 [shape = 's32[]', space=sflag, size = 0x4, offset = 0, fixed_abs, tag = 'sflag constant byte address 0x0 - dummy sync flag']
  #allocation10 [shape = 's32[]', space=sflag, size = 0x4, offset = 0, fixed_abs, tag = 'sflag constant byte address 0x0 - dummy sync flag']
  #allocation11 [shape = 's32[]', space=sflag, size = 0x4, offset = 0, fixed_abs, tag = 'sflag constant byte address 0x0 - dummy sync flag']
  #allocation12 [shape = 's32[]', space=sflag, size = 0x4, offset = 0, fixed_abs, tag = 'sflag constant byte address 0x0 - dummy sync flag']
  #allocation13 [shape = 's32[]', space=sflag, size = 0x4, offset = 0, fixed_abs, tag = 'sflag constant byte address 0x0 - dummy sync flag']
  #allocation14 [shape = 's32[]', space=sflag, size = 0x4, offset = 0, fixed_abs, tag = 'sflag constant byte address 0x0 - dummy sync flag']
  %s0 = inlined_call_operand.vmem [shape: s32[256], index: 0, kind: input, shape index: {}]
  %s1 = inlined_call_operand.vmem [shape: f32[512,8], index: 1, kind: input, shape index: {}]
  %s2 = inlined_call_operand.vmem [shape: f32[256,8], index: 2, kind: output, shape index: {}]
  %s3 = sld [smem:[#allocation0]]
  $region291: #{tpu_custom_call.1} parent=0
    _
  %s5 = ssub.s32 1, %s3
  %s6 = scalar_select 0, %s5, %s3
  %s7 = sshll.u32 %s0, 4
  %s8 = int_to_ptr.vmem [resolvable:$true] %s7
  %10 = dma.vmem_to_smem %s8, 32, [#allocation5], [#allocation4]
  %11 = dma.done [#allocation4], 32
  %12 = sfence
  %s13 = smul.u32 0, 256
  %s14 = sld [smem:[#allocation5 + %s13]]
  %s15 = scalar_lea.vmem %s1, %s14
  %p17 = scmp.lt.u32.totalorder 1, 8
  %p18 = pneg %p17
  // Predicated region
  $region2: #{tpu_custom_call.1} parent=0 // pred_check
    _
  $region3: #{tpu_custom_call.1} parent=0 // pred_check_branch
    %20 = sbr.rel (%p17) target = $region5
  $region4: #{tpu_custom_call.1} parent=0 // pred_region
    %s35 = sand.u32 1, 7
    %p36 = scmp.eq.s32.totalorder %s35, 0
    %p37 = pneg %p36
    // Predicated region
    $region17: #{tpu_custom_call.1} parent=4 // pred_check
      _
    $region18: #{tpu_custom_call.1} parent=4 // pred_check_branch
      %39 = sbr.rel (%p36) target = $region20
    $region19: #{tpu_custom_call.1} parent=4 // pred_region
      %s40 = sand.u32 1, 7
      %s41 = ssub.s32 1, %s40
      %s42 = scalar_lea.vmem %s15, %s41
      %s43 = ssub.s32 1, %s40
      %s44 = scalar_lea.vmem [#allocation2], %s43
      %s45 = sshllo.u32 0, %s40
      loop: start=0, step=1, limit=1
      $region21: #{tpu_custom_call.1} parent=19 // loop_pre_header
        _
      $region22: #{tpu_custom_call.1} parent=19 // loop_header
        %s47 = sphi 0, %s51
        %p48 = scmp.ge.s32.totalorder %s47, 1
        %s52 = sphi %s42, %s42
        %s53 = sphi %s44, %s44
      $region23: #{tpu_custom_call.1} parent=19 // loop_header_branch
        %50 = sbr.rel (%p48) target = $region27
      $region24: #{tpu_custom_call.1} parent=19 // loop_body
        %v54 = vld [vmem:[%s52] sm:%s45]
        %55 = vst [vmem:[%s53] sm:%s45] %v54
      $region25: #{tpu_custom_call.1} parent=19 // loop_footer
        %s51 = sadd.s32 1, %s47
      $region26: #{tpu_custom_call.1} parent=19 // loop_footer_branch
        %46 = sbr.rel target = $region22
      $region27: #{tpu_custom_call.1} parent=19 // loop_exit
        _
    $region20: #{tpu_custom_call.1} parent=4 // pred_fallthru
      _
  $region5: #{tpu_custom_call.1} parent=0 // pred_fallthru
    _
  // Predicated region
  $region6: #{tpu_custom_call.1} parent=0 // pred_check
    %p21 = pneg %p17
  $region7: #{tpu_custom_call.1} parent=0 // pred_check_branch
    %23 = sbr.rel (%p21) target = $region9
  $region8: #{tpu_custom_call.1} parent=0 // pred_region
    %s24 = sshllo.u32 0, 1
    loop: start=0, step=1, limit=1
    $region10: #{tpu_custom_call.1} parent=8 // loop_pre_header
      _
    $region11: #{tpu_custom_call.1} parent=8 // loop_header
      %s26 = sphi 0, %s30
      %p27 = scmp.ge.s32.totalorder %s26, 1
      %s31 = sphi %s15, %s15
      %s32 = sphi [#allocation2], [#allocation2]
    $region12: #{tpu_custom_call.1} parent=8 // loop_header_branch
      %29 = sbr.rel (%p27) target = $region16
    $region13: #{tpu_custom_call.1} parent=8 // loop_body
      %v33 = vld [vmem:[%s31] sm:%s24]
      %34 = vst [vmem:[%s32] sm:%s24] %v33
    $region14: #{tpu_custom_call.1} parent=8 // loop_footer
      %s30 = sadd.s32 1, %s26
    $region15: #{tpu_custom_call.1} parent=8 // loop_footer_branch
      %25 = sbr.rel target = $region11
    $region16: #{tpu_custom_call.1} parent=8 // loop_exit
      _
  $region9: #{tpu_custom_call.1} parent=0 // pred_fallthru
    _
  // Predicated region
  $region28: #{tpu_custom_call.1} parent=0 // pred_check
    _
  $region29: #{tpu_custom_call.1} parent=0 // pred_check_branch
    %58 = sbr.rel (0) target = $region31
  $region30: #{tpu_custom_call.1} parent=0 // pred_region
    %59 = vsyncadd [#allocation3], 16
  $region31: #{tpu_custom_call.1} parent=0 // pred_fallthru
    _
  %s60 = sadd.s32 %s13, 1
  %s61 = sld [smem:[#allocation5 + %s60]]
  %s62 = scalar_lea.vmem %s1, %s61
  %s63 = scalar_lea.vmem [#allocation2], 1
  %s64 = scalar_lea.sflag [#allocation3], 1
  %p66 = scmp.lt.u32.totalorder 1, 8
  %p67 = pneg %p66
  // Predicated region
  $region32: #{tpu_custom_call.1} parent=0 // pred_check
    _
  $region33: #{tpu_custom_call.1} parent=0 // pred_check_branch
    %69 = sbr.rel (%p66) target = $region35
  $region34: #{tpu_custom_call.1} parent=0 // pred_region
    %s84 = sand.u32 1, 7
    %p85 = scmp.eq.s32.totalorder %s84, 0
    %p86 = pneg %p85
    // Predicated region
    $region47: #{tpu_custom_call.1} parent=34 // pred_check
      _
    $region48: #{tpu_custom_call.1} parent=34 // pred_check_branch
      %88 = sbr.rel (%p85) target = $region50
    $region49: #{tpu_custom_call.1} parent=34 // pred_region
      %s89 = sand.u32 1, 7
      %s90 = ssub.s32 1, %s89
      %s91 = scalar_lea.vmem %s62, %s90
      %s92 = ssub.s32 1, %s89
      %s93 = scalar_lea.vmem %s63, %s92 [#allocation2]
      %s94 = sshllo.u32 0, %s89
      loop: start=0, step=1, limit=1
      $region51: #{tpu_custom_call.1} parent=49 // loop_pre_header
        _
      $region52: #{tpu_custom_call.1} parent=49 // loop_header
        %s96 = sphi 0, %s100
        %p97 = scmp.ge.s32.totalorder %s96, 1
        %s101 = sphi %s91, %s91
        %s102 = sphi %s93, %s93
      $region53: #{tpu_custom_call.1} parent=49 // loop_header_branch
        %99 = sbr.rel (%p97) target = $region57
      $region54: #{tpu_custom_call.1} parent=49 // loop_body
        %v103 = vld [vmem:[%s101] sm:%s94]
        %104 = vst [vmem:[%s102] sm:%s94] %v103
      $region55: #{tpu_custom_call.1} parent=49 // loop_footer
        %s100 = sadd.s32 1, %s96
      $region56: #{tpu_custom_call.1} parent=49 // loop_footer_branch
        %95 = sbr.rel target = $region52
      $region57: #{tpu_custom_call.1} parent=49 // loop_exit
        _
    $region50: #{tpu_custom_call.1} parent=34 // pred_fallthru
      _
  $region35: #{tpu_custom_call.1} parent=0 // pred_fallthru
    _
  // Predicated region
  $region36: #{tpu_custom_call.1} parent=0 // pred_check
    %p70 = pneg %p66
  $region37: #{tpu_custom_call.1} parent=0 // pred_check_branch
    %72 = sbr.rel (%p70) target = $region39
  $region38: #{tpu_custom_call.1} parent=0 // pred_region
    %s73 = sshllo.u32 0, 1
    loop: start=0, step=1, limit=1
    $region40: #{tpu_custom_call.1} parent=38 // loop_pre_header
      _
    $region41: #{tpu_custom_call.1} parent=38 // loop_header
      %s75 = sphi 0, %s79
      %p76 = scmp.ge.s32.totalorder %s75, 1
      %s80 = sphi %s62, %s62
      %s81 = sphi %s63, %s63
    $region42: #{tpu_custom_call.1} parent=38 // loop_header_branch
      %78 = sbr.rel (%p76) target = $region46
    $region43: #{tpu_custom_call.1} parent=38 // loop_body
      %v82 = vld [vmem:[%s80] sm:%s73]
      %83 = vst [vmem:[%s81] sm:%s73] %v82
    $region44: #{tpu_custom_call.1} parent=38 // loop_footer
      %s79 = sadd.s32 1, %s75
    $region45: #{tpu_custom_call.1} parent=38 // loop_footer_branch
      %74 = sbr.rel target = $region41
    $region46: #{tpu_custom_call.1} parent=38 // loop_exit
      _
  $region39: #{tpu_custom_call.1} parent=0 // pred_fallthru
    _
  // Predicated region
  $region58: #{tpu_custom_call.1} parent=0 // pred_check
    _
  $region59: #{tpu_custom_call.1} parent=0 // pred_check_branch
    %107 = sbr.rel (0) target = $region61
  $region60: #{tpu_custom_call.1} parent=0 // pred_region
    %108 = vsyncadd %s64, 16
  $region61: #{tpu_custom_call.1} parent=0 // pred_fallthru
    _
  %s109 = sadd.s32 %s13, 2
  %s110 = sld [smem:[#allocation5 + %s109]]
  %s111 = scalar_lea.vmem %s1, %s110
  %s112 = scalar_lea.vmem [#allocation2], 2
  %s113 = scalar_lea.sflag [#allocation3], 2
  %p115 = scmp.lt.u32.totalorder 1, 8
  %p116 = pneg %p115
  // Predicated region
  $region62: #{tpu_custom_call.1} parent=0 // pred_check
    _
  $region63: #{tpu_custom_call.1} parent=0 // pred_check_branch
    %118 = sbr.rel (%p115) target = $region65
  $region64: #{tpu_custom_call.1} parent=0 // pred_region
    %s133 = sand.u32 1, 7
    %p134 = scmp.eq.s32.totalorder %s133, 0
    %p135 = pneg %p134
    // Predicated region
    $region77: #{tpu_custom_call.1} parent=64 // pred_check
      _
    $region78: #{tpu_custom_call.1} parent=64 // pred_check_branch
      %137 = sbr.rel (%p134) target = $region80
    $region79: #{tpu_custom_call.1} parent=64 // pred_region
      %s138 = sand.u32 1, 7
      %s139 = ssub.s32 1, %s138
      %s140 = scalar_lea.vmem %s111, %s139
      %s141 = ssub.s32 1, %s138
      %s142 = scalar_lea.vmem %s112, %s141 [#allocation2]
      %s143 = sshllo.u32 0, %s138
      loop: start=0, step=1, limit=1
      $region81: #{tpu_custom_call.1} parent=79 // loop_pre_header
        _
      $region82: #{tpu_custom_call.1} parent=79 // loop_header
        %s145 = sphi 0, %s149
        %p146 = scmp.ge.s32.totalorder %s145, 1
        %s150 = sphi %s140, %s140
        %s151 = sphi %s142, %s142
      $region83: #{tpu_custom_call.1} parent=79 // loop_header_branch
        %148 = sbr.rel (%p146) target = $region87
      $region84: #{tpu_custom_call.1} parent=79 // loop_body
        %v152 = vld [vmem:[%s150] sm:%s143]
        %153 = vst [vmem:[%s151] sm:%s143] %v152
      $region85: #{tpu_custom_call.1} parent=79 // loop_footer
        %s149 = sadd.s32 1, %s145
      $region86: #{tpu_custom_call.1} parent=79 // loop_footer_branch
        %144 = sbr.rel target = $region82
      $region87: #{tpu_custom_call.1} parent=79 // loop_exit
        _
    $region80: #{tpu_custom_call.1} parent=64 // pred_fallthru
      _
  $region65: #{tpu_custom_call.1} parent=0 // pred_fallthru
    _
  // Predicated region
  $region66: #{tpu_custom_call.1} parent=0 // pred_check
    %p119 = pneg %p115
  $region67: #{tpu_custom_call.1} parent=0 // pred_check_branch
    %121 = sbr.rel (%p119) target = $region69
  $region68: #{tpu_custom_call.1} parent=0 // pred_region
    %s122 = sshllo.u32 0, 1
    loop: start=0, step=1, limit=1
    $region70: #{tpu_custom_call.1} parent=68 // loop_pre_header
      _
    $region71: #{tpu_custom_call.1} parent=68 // loop_header
      %s124 = sphi 0, %s128
      %p125 = scmp.ge.s32.totalorder %s124, 1
      %s129 = sphi %s111, %s111
      %s130 = sphi %s112, %s112
    $region72: #{tpu_custom_call.1} parent=68 // loop_header_branch
      %127 = sbr.rel (%p125) target = $region76
    $region73: #{tpu_custom_call.1} parent=68 // loop_body
      %v131 = vld [vmem:[%s129] sm:%s122]
      %132 = vst [vmem:[%s130] sm:%s122] %v131
    $region74: #{tpu_custom_call.1} parent=68 // loop_footer
      %s128 = sadd.s32 1, %s124
    $region75: #{tpu_custom_call.1} parent=68 // loop_footer_branch
      %123 = sbr.rel target = $region71
    $region76: #{tpu_custom_call.1} parent=68 // loop_exit
      _
  $region69: #{tpu_custom_call.1} parent=0 // pred_fallthru
    _
  // Predicated region
  $region88: #{tpu_custom_call.1} parent=0 // pred_check
    _
  $region89: #{tpu_custom_call.1} parent=0 // pred_check_branch
    %156 = sbr.rel (0) target = $region91
  $region90: #{tpu_custom_call.1} parent=0 // pred_region
    %157 = vsyncadd %s113, 16
  $region91: #{tpu_custom_call.1} parent=0 // pred_fallthru
    _
  %s158 = sadd.s32 %s13, 3
  %s159 = sld [smem:[#allocation5 + %s158]]
  %s160 = scalar_lea.vmem %s1, %s159
  %s161 = scalar_lea.vmem [#allocation2], 3
  %s162 = scalar_lea.sflag [#allocation3], 3
  %p164 = scmp.lt.u32.totalorder 1, 8
  %p165 = pneg %p164
  // Predicated region
  $region92: #{tpu_custom_call.1} parent=0 // pred_check
    _
  $region93: #{tpu_custom_call.1} parent=0 // pred_check_branch
    %167 = sbr.rel (%p164) target = $region95
  $region94: #{tpu_custom_call.1} parent=0 // pred_region
    %s182 = sand.u32 1, 7
    %p183 = scmp.eq.s32.totalorder %s182, 0
    %p184 = pneg %p183
    // Predicated region
    $region107: #{tpu_custom_call.1} parent=94 // pred_check
      _
    $region108: #{tpu_custom_call.1} parent=94 // pred_check_branch
      %186 = sbr.rel (%p183) target = $region110
    $region109: #{tpu_custom_call.1} parent=94 // pred_region
      %s187 = sand.u32 1, 7
      %s188 = ssub.s32 1, %s187
      %s189 = scalar_lea.vmem %s160, %s188
      %s190 = ssub.s32 1, %s187
      %s191 = scalar_lea.vmem %s161, %s190 [#allocation2]
      %s192 = sshllo.u32 0, %s187
      loop: start=0, step=1, limit=1
      $region111: #{tpu_custom_call.1} parent=109 // loop_pre_header
        _
      $region112: #{tpu_custom_call.1} parent=109 // loop_header
        %s194 = sphi 0, %s198
        %p195 = scmp.ge.s32.totalorder %s194, 1
        %s199 = sphi %s189, %s189
        %s200 = sphi %s191, %s191
      $region113: #{tpu_custom_call.1} parent=109 // loop_header_branch
        %197 = sbr.rel (%p195) target = $region117
      $region114: #{tpu_custom_call.1} parent=109 // loop_body
        %v201 = vld [vmem:[%s199] sm:%s192]
        %202 = vst [vmem:[%s200] sm:%s192] %v201
      $region115: #{tpu_custom_call.1} parent=109 // loop_footer
        %s198 = sadd.s32 1, %s194
      $region116: #{tpu_custom_call.1} parent=109 // loop_footer_branch
        %193 = sbr.rel target = $region112
      $region117: #{tpu_custom_call.1} parent=109 // loop_exit
        _
    $region110: #{tpu_custom_call.1} parent=94 // pred_fallthru
      _
  $region95: #{tpu_custom_call.1} parent=0 // pred_fallthru
    _
  // Predicated region
  $region96: #{tpu_custom_call.1} parent=0 // pred_check
    %p168 = pneg %p164
  $region97: #{tpu_custom_call.1} parent=0 // pred_check_branch
    %170 = sbr.rel (%p168) target = $region99
  $region98: #{tpu_custom_call.1} parent=0 // pred_region
    %s171 = sshllo.u32 0, 1
    loop: start=0, step=1, limit=1
    $region100: #{tpu_custom_call.1} parent=98 // loop_pre_header
      _
    $region101: #{tpu_custom_call.1} parent=98 // loop_header
      %s173 = sphi 0, %s177
      %p174 = scmp.ge.s32.totalorder %s173, 1
      %s178 = sphi %s160, %s160
      %s179 = sphi %s161, %s161
    $region102: #{tpu_custom_call.1} parent=98 // loop_header_branch
      %176 = sbr.rel (%p174) target = $region106
    $region103: #{tpu_custom_call.1} parent=98 // loop_body
      %v180 = vld [vmem:[%s178] sm:%s171]
      %181 = vst [vmem:[%s179] sm:%s171] %v180
    $region104: #{tpu_custom_call.1} parent=98 // loop_footer
      %s177 = sadd.s32 1, %s173
    $region105: #{tpu_custom_call.1} parent=98 // loop_footer_branch
      %172 = sbr.rel target = $region101
    $region106: #{tpu_custom_call.1} parent=98 // loop_exit
      _
  $region99: #{tpu_custom_call.1} parent=0 // pred_fallthru
    _
  // Predicated region
  $region118: #{tpu_custom_call.1} parent=0 // pred_check
    _
  $region119: #{tpu_custom_call.1} parent=0 // pred_check_branch
    %205 = sbr.rel (0) target = $region121
  $region120: #{tpu_custom_call.1} parent=0 // pred_region
    %206 = vsyncadd %s162, 16
  $region121: #{tpu_custom_call.1} parent=0 // pred_fallthru
    _
  %s207 = sadd.s32 %s13, 4
  %s208 = sld [smem:[#allocation5 + %s207]]
  %s209 = scalar_lea.vmem %s1, %s208
  %s210 = scalar_lea.vmem [#allocation2], 4
  %s211 = scalar_lea.sflag [#allocation3], 4
  %p213 = scmp.lt.u32.totalorder 1, 8
  %p214 = pneg %p213
  // Predicated region
  $region122: #{tpu_custom_call.1} parent=0 // pred_check
    _
  $region123: #{tpu_custom_call.1} parent=0 // pred_check_branch
    %216 = sbr.rel (%p213) target = $region125
  $region124: #{tpu_custom_call.1} parent=0 // pred_region
    %s231 = sand.u32 1, 7
    %p232 = scmp.eq.s32.totalorder %s231, 0
    %p233 = pneg %p232
    // Predicated region
    $region137: #{tpu_custom_call.1} parent=124 // pred_check
      _
    $region138: #{tpu_custom_call.1} parent=124 // pred_check_branch
      %235 = sbr.rel (%p232) target = $region140
    $region139: #{tpu_custom_call.1} parent=124 // pred_region
      %s236 = sand.u32 1, 7
      %s237 = ssub.s32 1, %s236
      %s238 = scalar_lea.vmem %s209, %s237
      %s239 = ssub.s32 1, %s236
      %s240 = scalar_lea.vmem %s210, %s239 [#allocation2]
      %s241 = sshllo.u32 0, %s236
      loop: start=0, step=1, limit=1
      $region141: #{tpu_custom_call.1} parent=139 // loop_pre_header
        _
      $region142: #{tpu_custom_call.1} parent=139 // loop_header
        %s243 = sphi 0, %s247
        %p244 = scmp.ge.s32.totalorder %s243, 1
        %s248 = sphi %s238, %s238
        %s249 = sphi %s240, %s240
      $region143: #{tpu_custom_call.1} parent=139 // loop_header_branch
        %246 = sbr.rel (%p244) target = $region147
      $region144: #{tpu_custom_call.1} parent=139 // loop_body
        %v250 = vld [vmem:[%s248] sm:%s241]
        %251 = vst [vmem:[%s249] sm:%s241] %v250
      $region145: #{tpu_custom_call.1} parent=139 // loop_footer
        %s247 = sadd.s32 1, %s243
      $region146: #{tpu_custom_call.1} parent=139 // loop_footer_branch
        %242 = sbr.rel target = $region142
      $region147: #{tpu_custom_call.1} parent=139 // loop_exit
        _
    $region140: #{tpu_custom_call.1} parent=124 // pred_fallthru
      _
  $region125: #{tpu_custom_call.1} parent=0 // pred_fallthru
    _
  // Predicated region
  $region126: #{tpu_custom_call.1} parent=0 // pred_check
    %p217 = pneg %p213
  $region127: #{tpu_custom_call.1} parent=0 // pred_check_branch
    %219 = sbr.rel (%p217) target = $region129
  $region128: #{tpu_custom_call.1} parent=0 // pred_region
    %s220 = sshllo.u32 0, 1
    loop: start=0, step=1, limit=1
    $region130: #{tpu_custom_call.1} parent=128 // loop_pre_header
      _
    $region131: #{tpu_custom_call.1} parent=128 // loop_header
      %s222 = sphi 0, %s226
      %p223 = scmp.ge.s32.totalorder %s222, 1
      %s227 = sphi %s209, %s209
      %s228 = sphi %s210, %s210
    $region132: #{tpu_custom_call.1} parent=128 // loop_header_branch
      %225 = sbr.rel (%p223) target = $region136
    $region133: #{tpu_custom_call.1} parent=128 // loop_body
      %v229 = vld [vmem:[%s227] sm:%s220]
      %230 = vst [vmem:[%s228] sm:%s220] %v229
    $region134: #{tpu_custom_call.1} parent=128 // loop_footer
      %s226 = sadd.s32 1, %s222
    $region135: #{tpu_custom_call.1} parent=128 // loop_footer_branch
      %221 = sbr.rel target = $region131
    $region136: #{tpu_custom_call.1} parent=128 // loop_exit
      _
  $region129: #{tpu_custom_call.1} parent=0 // pred_fallthru
    _
  // Predicated region
  $region148: #{tpu_custom_call.1} parent=0 // pred_check
    _
  $region149: #{tpu_custom_call.1} parent=0 // pred_check_branch
    %254 = sbr.rel (0) target = $region151
  $region150: #{tpu_custom_call.1} parent=0 // pred_region
    %255 = vsyncadd %s211, 16
  $region151: #{tpu_custom_call.1} parent=0 // pred_fallthru
    _
  %s256 = sadd.s32 %s13, 5
  %s257 = sld [smem:[#allocation5 + %s256]]
  %s258 = scalar_lea.vmem %s1, %s257
  %s259 = scalar_lea.vmem [#allocation2], 5
  %s260 = scalar_lea.sflag [#allocation3], 5
  %p262 = scmp.lt.u32.totalorder 1, 8
  %p263 = pneg %p262
  // Predicated region
  $region152: #{tpu_custom_call.1} parent=0 // pred_check
    _
  $region153: #{tpu_custom_call.1} parent=0 // pred_check_branch
    %265 = sbr.rel (%p262) target = $region155
  $region154: #{tpu_custom_call.1} parent=0 // pred_region
    %s280 = sand.u32 1, 7
    %p281 = scmp.eq.s32.totalorder %s280, 0
    %p282 = pneg %p281
    // Predicated region
    $region167: #{tpu_custom_call.1} parent=154 // pred_check
      _
    $region168: #{tpu_custom_call.1} parent=154 // pred_check_branch
      %284 = sbr.rel (%p281) target = $region170
    $region169: #{tpu_custom_call.1} parent=154 // pred_region
      %s285 = sand.u32 1, 7
      %s286 = ssub.s32 1, %s285
      %s287 = scalar_lea.vmem %s258, %s286
      %s288 = ssub.s32 1, %s285
      %s289 = scalar_lea.vmem %s259, %s288 [#allocation2]
      %s290 = sshllo.u32 0, %s285
      loop: start=0, step=1, limit=1
      $region171: #{tpu_custom_call.1} parent=169 // loop_pre_header
        _
      $region172: #{tpu_custom_call.1} parent=169 // loop_header
        %s292 = sphi 0, %s296
        %p293 = scmp.ge.s32.totalorder %s292, 1
        %s297 = sphi %s287, %s287
        %s298 = sphi %s289, %s289
      $region173: #{tpu_custom_call.1} parent=169 // loop_header_branch
        %295 = sbr.rel (%p293) target = $region177
      $region174: #{tpu_custom_call.1} parent=169 // loop_body
        %v299 = vld [vmem:[%s297] sm:%s290]
        %300 = vst [vmem:[%s298] sm:%s290] %v299
      $region175: #{tpu_custom_call.1} parent=169 // loop_footer
        %s296 = sadd.s32 1, %s292
      $region176: #{tpu_custom_call.1} parent=169 // loop_footer_branch
        %291 = sbr.rel target = $region172
      $region177: #{tpu_custom_call.1} parent=169 // loop_exit
        _
    $region170: #{tpu_custom_call.1} parent=154 // pred_fallthru
      _
  $region155: #{tpu_custom_call.1} parent=0 // pred_fallthru
    _
  // Predicated region
  $region156: #{tpu_custom_call.1} parent=0 // pred_check
    %p266 = pneg %p262
  $region157: #{tpu_custom_call.1} parent=0 // pred_check_branch
    %268 = sbr.rel (%p266) target = $region159
  $region158: #{tpu_custom_call.1} parent=0 // pred_region
    %s269 = sshllo.u32 0, 1
    loop: start=0, step=1, limit=1
    $region160: #{tpu_custom_call.1} parent=158 // loop_pre_header
      _
    $region161: #{tpu_custom_call.1} parent=158 // loop_header
      %s271 = sphi 0, %s275
      %p272 = scmp.ge.s32.totalorder %s271, 1
      %s276 = sphi %s258, %s258
      %s277 = sphi %s259, %s259
    $region162: #{tpu_custom_call.1} parent=158 // loop_header_branch
      %274 = sbr.rel (%p272) target = $region166
    $region163: #{tpu_custom_call.1} parent=158 // loop_body
      %v278 = vld [vmem:[%s276] sm:%s269]
      %279 = vst [vmem:[%s277] sm:%s269] %v278
    $region164: #{tpu_custom_call.1} parent=158 // loop_footer
      %s275 = sadd.s32 1, %s271
    $region165: #{tpu_custom_call.1} parent=158 // loop_footer_branch
      %270 = sbr.rel target = $region161
    $region166: #{tpu_custom_call.1} parent=158 // loop_exit
      _
  $region159: #{tpu_custom_call.1} parent=0 // pred_fallthru
    _
  // Predicated region
  $region178: #{tpu_custom_call.1} parent=0 // pred_check
    _
  $region179: #{tpu_custom_call.1} parent=0 // pred_check_branch
    %303 = sbr.rel (0) target = $region181
  $region180: #{tpu_custom_call.1} parent=0 // pred_region
    %304 = vsyncadd %s260, 16
  $region181: #{tpu_custom_call.1} parent=0 // pred_fallthru
    _
  %s305 = sadd.s32 %s13, 6
  %s306 = sld [smem:[#allocation5 + %s305]]
  %s307 = scalar_lea.vmem %s1, %s306
  %s308 = scalar_lea.vmem [#allocation2], 6
  %s309 = scalar_lea.sflag [#allocation3], 6
  %p311 = scmp.lt.u32.totalorder 1, 8
  %p312 = pneg %p311
  // Predicated region
  $region182: #{tpu_custom_call.1} parent=0 // pred_check
    _
  $region183: #{tpu_custom_call.1} parent=0 // pred_check_branch
    %314 = sbr.rel (%p311) target = $region185
  $region184: #{tpu_custom_call.1} parent=0 // pred_region
    %s329 = sand.u32 1, 7
    %p330 = scmp.eq.s32.totalorder %s329, 0
    %p331 = pneg %p330
    // Predicated region
    $region197: #{tpu_custom_call.1} parent=184 // pred_check
      _
    $region198: #{tpu_custom_call.1} parent=184 // pred_check_branch
      %333 = sbr.rel (%p330) target = $region200
    $region199: #{tpu_custom_call.1} parent=184 // pred_region
      %s334 = sand.u32 1, 7
      %s335 = ssub.s32 1, %s334
      %s336 = scalar_lea.vmem %s307, %s335
      %s337 = ssub.s32 1, %s334
      %s338 = scalar_lea.vmem %s308, %s337 [#allocation2]
      %s339 = sshllo.u32 0, %s334
      loop: start=0, step=1, limit=1
      $region201: #{tpu_custom_call.1} parent=199 // loop_pre_header
        _
      $region202: #{tpu_custom_call.1} parent=199 // loop_header
        %s341 = sphi 0, %s345
        %p342 = scmp.ge.s32.totalorder %s341, 1
        %s346 = sphi %s336, %s336
        %s347 = sphi %s338, %s338
      $region203: #{tpu_custom_call.1} parent=199 // loop_header_branch
        %344 = sbr.rel (%p342) target = $region207
      $region204: #{tpu_custom_call.1} parent=199 // loop_body
        %v348 = vld [vmem:[%s346] sm:%s339]
        %349 = vst [vmem:[%s347] sm:%s339] %v348
      $region205: #{tpu_custom_call.1} parent=199 // loop_footer
        %s345 = sadd.s32 1, %s341
      $region206: #{tpu_custom_call.1} parent=199 // loop_footer_branch
        %340 = sbr.rel target = $region202
      $region207: #{tpu_custom_call.1} parent=199 // loop_exit
        _
    $region200: #{tpu_custom_call.1} parent=184 // pred_fallthru
      _
  $region185: #{tpu_custom_call.1} parent=0 // pred_fallthru
    _
  // Predicated region
  $region186: #{tpu_custom_call.1} parent=0 // pred_check
    %p315 = pneg %p311
  $region187: #{tpu_custom_call.1} parent=0 // pred_check_branch
    %317 = sbr.rel (%p315) target = $region189
  $region188: #{tpu_custom_call.1} parent=0 // pred_region
    %s318 = sshllo.u32 0, 1
    loop: start=0, step=1, limit=1
    $region190: #{tpu_custom_call.1} parent=188 // loop_pre_header
      _
    $region191: #{tpu_custom_call.1} parent=188 // loop_header
      %s320 = sphi 0, %s324
      %p321 = scmp.ge.s32.totalorder %s320, 1
      %s325 = sphi %s307, %s307
      %s326 = sphi %s308, %s308
    $region192: #{tpu_custom_call.1} parent=188 // loop_header_branch
      %323 = sbr.rel (%p321) target = $region196
    $region193: #{tpu_custom_call.1} parent=188 // loop_body
      %v327 = vld [vmem:[%s325] sm:%s318]
      %328 = vst [vmem:[%s326] sm:%s318] %v327
    $region194: #{tpu_custom_call.1} parent=188 // loop_footer
      %s324 = sadd.s32 1, %s320
    $region195: #{tpu_custom_call.1} parent=188 // loop_footer_branch
      %319 = sbr.rel target = $region191
    $region196: #{tpu_custom_call.1} parent=188 // loop_exit
      _
  $region189: #{tpu_custom_call.1} parent=0 // pred_fallthru
    _
  // Predicated region
  $region208: #{tpu_custom_call.1} parent=0 // pred_check
    _
  $region209: #{tpu_custom_call.1} parent=0 // pred_check_branch
    %352 = sbr.rel (0) target = $region211
  $region210: #{tpu_custom_call.1} parent=0 // pred_region
    %353 = vsyncadd %s309, 16
  $region211: #{tpu_custom_call.1} parent=0 // pred_fallthru
    _
  %s354 = sadd.s32 %s13, 7
  %s355 = sld [smem:[#allocation5 + %s354]]
  %s356 = scalar_lea.vmem %s1, %s355
  %s357 = scalar_lea.vmem [#allocation2], 7
  %s358 = scalar_lea.sflag [#allocation3], 7
  %p360 = scmp.lt.u32.totalorder 1, 8
  %p361 = pneg %p360
  // Predicated region
  $region212: #{tpu_custom_call.1} parent=0 // pred_check
    _
  $region213: #{tpu_custom_call.1} parent=0 // pred_check_branch
    %363 = sbr.rel (%p360) target = $region215
  $region214: #{tpu_custom_call.1} parent=0 // pred_region
    %s378 = sand.u32 1, 7
    %p379 = scmp.eq.s32.totalorder %s378, 0
    %p380 = pneg %p379
    // Predicated region
    $region227: #{tpu_custom_call.1} parent=214 // pred_check
      _
    $region228: #{tpu_custom_call.1} parent=214 // pred_check_branch
      %382 = sbr.rel (%p379) target = $region230
    $region229: #{tpu_custom_call.1} parent=214 // pred_region
      %s383 = sand.u32 1, 7
      %s384 = ssub.s32 1, %s383
      %s385 = scalar_lea.vmem %s356, %s384
      %s386 = ssub.s32 1, %s383
      %s387 = scalar_lea.vmem %s357, %s386 [#allocation2]
      %s388 = sshllo.u32 0, %s383
      loop: start=0, step=1, limit=1
      $region231: #{tpu_custom_call.1} parent=229 // loop_pre_header
        _
      $region232: #{tpu_custom_call.1} parent=229 // loop_header
        %s390 = sphi 0, %s394
        %p391 = scmp.ge.s32.totalorder %s390, 1
        %s395 = sphi %s385, %s385
        %s396 = sphi %s387, %s387
      $region233: #{tpu_custom_call.1} parent=229 // loop_header_branch
        %393 = sbr.rel (%p391) target = $region237
      $region234: #{tpu_custom_call.1} parent=229 // loop_body
        %v397 = vld [vmem:[%s395] sm:%s388]
        %398 = vst [vmem:[%s396] sm:%s388] %v397
      $region235: #{tpu_custom_call.1} parent=229 // loop_footer
        %s394 = sadd.s32 1, %s390
      $region236: #{tpu_custom_call.1} parent=229 // loop_footer_branch
        %389 = sbr.rel target = $region232
      $region237: #{tpu_custom_call.1} parent=229 // loop_exit
        _
    $region230: #{tpu_custom_call.1} parent=214 // pred_fallthru
      _
  $region215: #{tpu_custom_call.1} parent=0 // pred_fallthru
    _
  // Predicated region
  $region216: #{tpu_custom_call.1} parent=0 // pred_check
    %p364 = pneg %p360
  $region217: #{tpu_custom_call.1} parent=0 // pred_check_branch
    %366 = sbr.rel (%p364) target = $region219
  $region218: #{tpu_custom_call.1} parent=0 // pred_region
    %s367 = sshllo.u32 0, 1
    loop: start=0, step=1, limit=1
    $region220: #{tpu_custom_call.1} parent=218 // loop_pre_header
      _
    $region221: #{tpu_custom_call.1} parent=218 // loop_header
      %s369 = sphi 0, %s373
      %p370 = scmp.ge.s32.totalorder %s369, 1
      %s374 = sphi %s356, %s356
      %s375 = sphi %s357, %s357
    $region222: #{tpu_custom_call.1} parent=218 // loop_header_branch
      %372 = sbr.rel (%p370) target = $region226
    $region223: #{tpu_custom_call.1} parent=218 // loop_body
      %v376 = vld [vmem:[%s374] sm:%s367]
      %377 = vst [vmem:[%s375] sm:%s367] %v376
    $region224: #{tpu_custom_call.1} parent=218 // loop_footer
      %s373 = sadd.s32 1, %s369
    $region225: #{tpu_custom_call.1} parent=218 // loop_footer_branch
      %368 = sbr.rel target = $region221
    $region226: #{tpu_custom_call.1} parent=218 // loop_exit
      _
  $region219: #{tpu_custom_call.1} parent=0 // pred_fallthru
    _
  // Predicated region
  $region238: #{tpu_custom_call.1} parent=0 // pred_check
    _
  $region239: #{tpu_custom_call.1} parent=0 // pred_check_branch
    %401 = sbr.rel (0) target = $region241
  $region240: #{tpu_custom_call.1} parent=0 // pred_region
    %402 = vsyncadd %s358, 16
  $region241: #{tpu_custom_call.1} parent=0 // pred_fallthru
    _
  loop: start=0, step=1, limit=256
  $region242: #{tpu_custom_call.1} parent=0 // loop_pre_header
    _
  $region243: #{tpu_custom_call.1} parent=0 // loop_header
    %s404 = sphi 0, %s408
    %p405 = scmp.ge.s32.totalorder %s404, 256
  $region244: #{tpu_custom_call.1} parent=0 // loop_header_branch
    %407 = sbr.rel (%p405) target = $region248
  $region245: #{tpu_custom_call.1} parent=0 // loop_body
    %s409 = sadd.s32 %s13, %s404
    %s410 = sld [smem:[#allocation5 + %s409]]
    %p411 = scmp.lt.s32.totalorder %s404, 0
    %s412 = ssub.s32 0, %s404
    %s413 = scalar_select %p411, %s412, %s404
    %s414 = sand.u32 %s413, 7
    %s415 = ssub.s32 0, %s414
    %s416 = scalar_select %p411, %s415, %s414
    %p417 = scmp.ne.s32.totalorder %s416, 0
    %p418 = scmp.lt.s32.totalorder %s416, 0
    %p419 = pnand %p418, %p417
    %p420 = pneg %p419
    %s421 = sadd.s32 %s416, 8
    %s422 = scalar_select %p420, %s421, %s416
    %s423 = scalar_lea.sflag [#allocation3], %s422
    %s424 = smul.u32 1, 1
    %s425 = sshll.u32 %s424, 4
    %426 = dma.done %s423, %s425
    %s427 = sadd.s32 %s404, 8
    %p428 = scmp.lt.s32.totalorder %s427, 256
    // Predicated region
    $region249: #{tpu_custom_call.1} parent=245 // pred_check
      %p429 = pneg %p428
    $region250: #{tpu_custom_call.1} parent=245 // pred_check_branch
      %431 = sbr.rel (%p429) target = $region252
    $region251: #{tpu_custom_call.1} parent=245 // pred_region
      %s432 = sadd.s32 %s13, %s427
      %s433 = sld [smem:[#allocation5 + %s432]]
      %p434 = scmp.lt.s32.totalorder %s427, 0
      %s435 = ssub.s32 0, %s427
      %s436 = scalar_select %p434, %s435, %s427
      %s437 = sand.u32 %s436, 7
      %s438 = ssub.s32 0, %s437
      %s439 = scalar_select %p434, %s438, %s437
      %p440 = scmp.ne.s32.totalorder %s439, 0
      %p441 = scmp.lt.s32.totalorder %s439, 0
      %p442 = pnand %p441, %p440
      %p443 = pneg %p442
      %s444 = sadd.s32 %s439, 8
      %s445 = scalar_select %p443, %s444, %s439
      %s446 = scalar_lea.vmem %s1, %s433
      %s447 = scalar_lea.vmem [#allocation2], %s427
      %s448 = scalar_lea.sflag [#allocation3], %s445
      %p450 = scmp.lt.u32.totalorder 1, 8
      %p451 = pneg %p450
      // Predicated region
      $region253: #{tpu_custom_call.1} parent=251 // pred_check
        _
      $region254: #{tpu_custom_call.1} parent=251 // pred_check_branch
        %453 = sbr.rel (%p450) target = $region256
      $region255: #{tpu_custom_call.1} parent=251 // pred_region
        %s468 = sand.u32 1, 7
        %p469 = scmp.eq.s32.totalorder %s468, 0
        %p470 = pneg %p469
        // Predicated region
        $region268: #{tpu_custom_call.1} parent=255 // pred_check
          _
        $region269: #{tpu_custom_call.1} parent=255 // pred_check_branch
          %472 = sbr.rel (%p469) target = $region271
        $region270: #{tpu_custom_call.1} parent=255 // pred_region
          %s473 = sand.u32 1, 7
          %s474 = ssub.s32 1, %s473
          %s475 = scalar_lea.vmem %s446, %s474
          %s476 = ssub.s32 1, %s473
          %s477 = scalar_lea.vmem %s447, %s476 [#allocation2]
          %s478 = sshllo.u32 0, %s473
          loop: start=0, step=1, limit=1
          $region272: #{tpu_custom_call.1} parent=270 // loop_pre_header
            _
          $region273: #{tpu_custom_call.1} parent=270 // loop_header
            %s480 = sphi 0, %s484
            %p481 = scmp.ge.s32.totalorder %s480, 1
            %s485 = sphi %s475, %s475
            %s486 = sphi %s477, %s477
          $region274: #{tpu_custom_call.1} parent=270 // loop_header_branch
            %483 = sbr.rel (%p481) target = $region278
          $region275: #{tpu_custom_call.1} parent=270 // loop_body
            %v487 = vld [vmem:[%s485] sm:%s478]
            %488 = vst [vmem:[%s486] sm:%s478] %v487
          $region276: #{tpu_custom_call.1} parent=270 // loop_footer
            %s484 = sadd.s32 1, %s480
          $region277: #{tpu_custom_call.1} parent=270 // loop_footer_branch
            %479 = sbr.rel target = $region273
          $region278: #{tpu_custom_call.1} parent=270 // loop_exit
            _
        $region271: #{tpu_custom_call.1} parent=255 // pred_fallthru
          _
      $region256: #{tpu_custom_call.1} parent=251 // pred_fallthru
        _
      // Predicated region
      $region257: #{tpu_custom_call.1} parent=251 // pred_check
        %p454 = pneg %p450
      $region258: #{tpu_custom_call.1} parent=251 // pred_check_branch
        %456 = sbr.rel (%p454) target = $region260
      $region259: #{tpu_custom_call.1} parent=251 // pred_region
        %s457 = sshllo.u32 0, 1
        loop: start=0, step=1, limit=1
        $region261: #{tpu_custom_call.1} parent=259 // loop_pre_header
          _
        $region262: #{tpu_custom_call.1} parent=259 // loop_header
          %s459 = sphi 0, %s463
          %p460 = scmp.ge.s32.totalorder %s459, 1
          %s464 = sphi %s446, %s446
          %s465 = sphi %s447, %s447
        $region263: #{tpu_custom_call.1} parent=259 // loop_header_branch
          %462 = sbr.rel (%p460) target = $region267
        $region264: #{tpu_custom_call.1} parent=259 // loop_body
          %v466 = vld [vmem:[%s464] sm:%s457]
          %467 = vst [vmem:[%s465] sm:%s457] %v466
        $region265: #{tpu_custom_call.1} parent=259 // loop_footer
          %s463 = sadd.s32 1, %s459
        $region266: #{tpu_custom_call.1} parent=259 // loop_footer_branch
          %458 = sbr.rel target = $region262
        $region267: #{tpu_custom_call.1} parent=259 // loop_exit
          _
      $region260: #{tpu_custom_call.1} parent=251 // pred_fallthru
        _
      // Predicated region
      $region279: #{tpu_custom_call.1} parent=251 // pred_check
        _
      $region280: #{tpu_custom_call.1} parent=251 // pred_check_branch
        %491 = sbr.rel (0) target = $region282
      $region281: #{tpu_custom_call.1} parent=251 // pred_region
        %492 = vsyncadd %s448, 16
      $region282: #{tpu_custom_call.1} parent=251 // pred_fallthru
        _
    $region252: #{tpu_custom_call.1} parent=245 // pred_fallthru
      _
  $region246: #{tpu_custom_call.1} parent=0 // loop_footer
    %s408 = sadd.s32 1, %s404
  $region247: #{tpu_custom_call.1} parent=0 // loop_footer_branch
    %403 = sbr.rel target = $region243
  $region248: #{tpu_custom_call.1} parent=0 // loop_exit
    _
  %v493 = vld [vmem:[#allocation2] sm:$0xff]
  %v494 = vld [vmem:[#allocation2 + $0x8] sm:$0xff]
  %v495 = vld [vmem:[#allocation2 + $0x10] sm:$0xff]
  %v496 = vld [vmem:[#allocation2 + $0x18] sm:$0xff]
  %v497 = vld [vmem:[#allocation2 + $0x20] sm:$0xff]
  %v498 = vld [vmem:[#allocation2 + $0x28] sm:$0xff]
  %v499 = vld [vmem:[#allocation2 + $0x30] sm:$0xff]
  %v500 = vld [vmem:[#allocation2 + $0x38] sm:$0xff]
  %v501 = vld [vmem:[#allocation2 + $0x40] sm:$0xff]
  %v502 = vld [vmem:[#allocation2 + $0x48] sm:$0xff]
  %v503 = vld [vmem:[#allocation2 + $0x50] sm:$0xff]
  %v504 = vld [vmem:[#allocation2 + $0x58] sm:$0xff]
  %v505 = vld [vmem:[#allocation2 + $0x60] sm:$0xff]
  %v506 = vld [vmem:[#allocation2 + $0x68] sm:$0xff]
  %v507 = vld [vmem:[#allocation2 + $0x70] sm:$0xff]
  %v508 = vld [vmem:[#allocation2 + $0x78] sm:$0xff]
  %v509 = vld [vmem:[#allocation2 + $0x80] sm:$0xff]
  %v510 = vld [vmem:[#allocation2 + $0x88] sm:$0xff]
  %v511 = vld [vmem:[#allocation2 + $0x90] sm:$0xff]
  %v512 = vld [vmem:[#allocation2 + $0x98] sm:$0xff]
  %v513 = vld [vmem:[#allocation2 + $0xa0] sm:$0xff]
  %v514 = vld [vmem:[#allocation2 + $0xa8] sm:$0xff]
  %v515 = vld [vmem:[#allocation2 + $0xb0] sm:$0xff]
  %v516 = vld [vmem:[#allocation2 + $0xb8] sm:$0xff]
  %v517 = vld [vmem:[#allocation2 + $0xc0] sm:$0xff]
  %v518 = vld [vmem:[#allocation2 + $0xc8] sm:$0xff]
  %v519 = vld [vmem:[#allocation2 + $0xd0] sm:$0xff]
  %v520 = vld [vmem:[#allocation2 + $0xd8] sm:$0xff]
  %v521 = vld [vmem:[#allocation2 + $0xe0] sm:$0xff]
  %v522 = vld [vmem:[#allocation2 + $0xe8] sm:$0xff]
  %v523 = vld [vmem:[#allocation2 + $0xf0] sm:$0xff]
  %v524 = vld [vmem:[#allocation2 + $0xf8] sm:$0xff]
  %vm525 = vcmask 64512
  %526 = vst.msk [vmem:[%s2] sm:$0xff] %vm525, %v493
  %527 = vst.msk [vmem:[%s2 + $0x8] sm:$0xff] %vm525, %v494
  %528 = vst.msk [vmem:[%s2 + $0x10] sm:$0xff] %vm525, %v495
  %529 = vst.msk [vmem:[%s2 + $0x18] sm:$0xff] %vm525, %v496
  %530 = vst.msk [vmem:[%s2 + $0x20] sm:$0xff] %vm525, %v497
  %531 = vst.msk [vmem:[%s2 + $0x28] sm:$0xff] %vm525, %v498
  %532 = vst.msk [vmem:[%s2 + $0x30] sm:$0xff] %vm525, %v499
  %533 = vst.msk [vmem:[%s2 + $0x38] sm:$0xff] %vm525, %v500
  %534 = vst.msk [vmem:[%s2 + $0x40] sm:$0xff] %vm525, %v501
  %535 = vst.msk [vmem:[%s2 + $0x48] sm:$0xff] %vm525, %v502
  %536 = vst.msk [vmem:[%s2 + $0x50] sm:$0xff] %vm525, %v503
  %537 = vst.msk [vmem:[%s2 + $0x58] sm:$0xff] %vm525, %v504
  %538 = vst.msk [vmem:[%s2 + $0x60] sm:$0xff] %vm525, %v505
  %539 = vst.msk [vmem:[%s2 + $0x68] sm:$0xff] %vm525, %v506
  %540 = vst.msk [vmem:[%s2 + $0x70] sm:$0xff] %vm525, %v507
  %541 = vst.msk [vmem:[%s2 + $0x78] sm:$0xff] %vm525, %v508
  %542 = vst.msk [vmem:[%s2 + $0x80] sm:$0xff] %vm525, %v509
  %543 = vst.msk [vmem:[%s2 + $0x88] sm:$0xff] %vm525, %v510
  %544 = vst.msk [vmem:[%s2 + $0x90] sm:$0xff] %vm525, %v511
  %545 = vst.msk [vmem:[%s2 + $0x98] sm:$0xff] %vm525, %v512
  %546 = vst.msk [vmem:[%s2 + $0xa0] sm:$0xff] %vm525, %v513
  %547 = vst.msk [vmem:[%s2 + $0xa8] sm:$0xff] %vm525, %v514
  %548 = vst.msk [vmem:[%s2 + $0xb0] sm:$0xff] %vm525, %v515
  %549 = vst.msk [vmem:[%s2 + $0xb8] sm:$0xff] %vm525, %v516
  %550 = vst.msk [vmem:[%s2 + $0xc0] sm:$0xff] %vm525, %v517
  %551 = vst.msk [vmem:[%s2 + $0xc8] sm:$0xff] %vm525, %v518
  %552 = vst.msk [vmem:[%s2 + $0xd0] sm:$0xff] %vm525, %v519
  %553 = vst.msk [vmem:[%s2 + $0xd8] sm:$0xff] %vm525, %v520
  %554 = vst.msk [vmem:[%s2 + $0xe0] sm:$0xff] %vm525, %v521
  %555 = vst.msk [vmem:[%s2 + $0xe8] sm:$0xff] %vm525, %v522
  %556 = vst.msk [vmem:[%s2 + $0xf0] sm:$0xff] %vm525, %v523
  %557 = vst.msk [vmem:[%s2 + $0xf8] sm:$0xff] %vm525, %v524
  // Predicated region
  $region283: #{tpu_custom_call.1} parent=0 // pred_check
    _
  $region284: #{tpu_custom_call.1} parent=0 // pred_check_branch
    %559 = sbr.rel (0) target = $region286
  $region285: #{tpu_custom_call.1} parent=0 // pred_region
    _
  $region286: #{tpu_custom_call.1} parent=0 // pred_fallthru
    _
  // Predicated region
  $region287: #{tpu_custom_call.1} parent=0 // pred_check
    _
  $region288: #{tpu_custom_call.1} parent=0 // pred_check_branch
    %561 = sbr.rel (0) target = $region290
  $region289: #{tpu_custom_call.1} parent=0 // pred_region
    _
  $region290: #{tpu_custom_call.1} parent=0 // pred_fallthru
    _
  %562 = vsyncmov [#allocation3]
  %s563 = vpop.sfrf %562
  %p564 = scmp.eq.s32.totalorder %s563, 0
  %p565 = pneg %p564
  %567 = shalt.err (%p565)
  %s568 = scalar_lea.sflag [#allocation3], 1
  %569 = vsyncmov %s568
  %s570 = vpop.sfrf %569
  %p571 = scmp.eq.s32.totalorder %s570, 0
  %p572 = pneg %p571
  %574 = shalt.err (%p572)
  %s575 = scalar_lea.sflag [#allocation3], 2
  %576 = vsyncmov %s575
  %s577 = vpop.sfrf %576
  %p578 = scmp.eq.s32.totalorder %s577, 0
  %p579 = pneg %p578
  %581 = shalt.err (%p579)
  %s582 = scalar_lea.sflag [#allocation3], 3
  %583 = vsyncmov %s582
  %s584 = vpop.sfrf %583
  %p585 = scmp.eq.s32.totalorder %s584, 0
  %p586 = pneg %p585
  %588 = shalt.err (%p586)
  %s589 = scalar_lea.sflag [#allocation3], 4
  %590 = vsyncmov %s589
  %s591 = vpop.sfrf %590
  %p592 = scmp.eq.s32.totalorder %s591, 0
  %p593 = pneg %p592
  %595 = shalt.err (%p593)
  %s596 = scalar_lea.sflag [#allocation3], 5
  %597 = vsyncmov %s596
  %s598 = vpop.sfrf %597
  %p599 = scmp.eq.s32.totalorder %s598, 0
  %p600 = pneg %p599
  %602 = shalt.err (%p600)
  %s603 = scalar_lea.sflag [#allocation3], 6
  %604 = vsyncmov %s603
  %s605 = vpop.sfrf %604
  %p606 = scmp.eq.s32.totalorder %s605, 0
  %p607 = pneg %p606
  %609 = shalt.err (%p607)
  %s610 = scalar_lea.sflag [#allocation3], 7
  %611 = vsyncmov %s610
  %s612 = vpop.sfrf %611
  %p613 = scmp.eq.s32.totalorder %s612, 0
  %p614 = pneg %p613
  %616 = shalt.err (%p614)

</llo_original>
